<compile_context>
chip_gen: v7x
topology: tpu7x:2x2x1
jax: 0.10.0
libtpu: 0.0.40
codegen_flags: <defaults>
</compile_context>

<pallas_src>
import functools

import jax
import jax.numpy as jnp
from jax.experimental import pallas as pl
from jax.experimental.pallas import tpu as pltpu

LOG_STD_MIN = -20.0
LOG_STD_MAX = 2.0
HIDDEN = 100        # logical hidden size hard-coded in the PyTorch module
HIDDEN_P = 128      # lane-padded hidden size
LANE = 128
SUBLANE = 8


def _round_up(x, m):
    return (x + m - 1) // m * m


# ---------------------------------------------------------------------------
# Kernel
# ---------------------------------------------------------------------------
def _policy_kernel(x_ref,
                   w1_ref, b1_ref,
                   w2_ref, b2_ref,
                   w3_ref, b3_ref,
                   wh_ref, bh_ref,       # fused [mean | log_std] head
                   mean_ref, std_ref):
    w_dtype = w1_ref.dtype
    out_p = mean_ref.shape[-1]           # lane-padded output width (static)

    x = x_ref[...]
    if x.dtype != w_dtype:               # MXU operands in the weight dtype
        x = x.astype(w_dtype)

    # Backbone MLP: fc1 -> relu -> fc2 -> relu -> classifier.
    # f32 accumulation on the MXU, all elementwise math in f32.
    h = jnp.dot(x, w1_ref[...], preferred_element_type=jnp.float32) + b1_ref[...]
    h = jnp.maximum(h, 0.0)
    if w_dtype != jnp.float32:
        h = h.astype(w_dtype)
    h = jnp.dot(h, w2_ref[...], preferred_element_type=jnp.float32) + b2_ref[...]
    h = jnp.maximum(h, 0.0)
    if w_dtype != jnp.float32:
        h = h.astype(w_dtype)
    feats = jnp.dot(h, w3_ref[...], preferred_element_type=jnp.float32) + b3_ref[...]
    if w_dtype != jnp.float32:
        feats = feats.astype(w_dtype)

    # Fused heads: single MXU matmul, split at a lane-aligned (128-multiple) boundary.
    head = jnp.dot(feats, wh_ref[...], preferred_element_type=jnp.float32) + bh_ref[...]
    mean = head[:, :out_p]
    log_std = jnp.clip(head[:, out_p:], LOG_STD_MIN, LOG_STD_MAX)

    mean_ref[...] = mean                      # already f32, no convert on store path
    std_ref[...] = jnp.exp(log_std)           # padded lanes become exp(0)=1, sliced off


# ---------------------------------------------------------------------------
# Wrapper
# ---------------------------------------------------------------------------
@functools.partial(jax.jit, static_argnames=("output_dim", "tile_b"))
def policy_forward(state, params, *, output_dim, tile_b=512):
    """Returns (mean, std) of the output Normal distribution."""
    batch, d_in = state.shape
    d_in_p = params["w1"].shape[0]
    out_p = params["wh"].shape[1] // 2

    # Pad the state to the padded input width and a tile-aligned batch.
    batch_p = _round_up(max(batch, SUBLANE), SUBLANE)
    tile = min(tile_b, batch_p)
    batch_p = _round_up(batch_p, tile)
    x = state if state.dtype == jnp.float32 else state.astype(jnp.float32)
    x = jnp.pad(x, ((0, batch_p - batch), (0, d_in_p - d_in)))

    grid = (batch_p // tile,)
    resident = lambda i: (0, 0)    # weights/biases stay resident in VMEM across steps
    batched = lambda i: (i, 0)     # batch-tiled, double-buffered by the Pallas runtime

    flops = 2 * batch_p * (d_in_p * HIDDEN_P
                           + 2 * HIDDEN_P * HIDDEN_P
                           + HIDDEN_P * 2 * out_p)
    weight_bytes = sum(int(v.size) * v.dtype.itemsize for v in params.values())
    bytes_accessed = (int(x.size) * x.dtype.itemsize
                      + weight_bytes
                      + 2 * batch_p * out_p * 4)

    mean_p, std_p = pl.pallas_call(
        _policy_kernel,
        out_shape=(
            jax.ShapeDtypeStruct((batch_p, out_p), jnp.float32),
            jax.ShapeDtypeStruct((batch_p, out_p), jnp.float32),
        ),
        grid=grid,
        in_specs=[
            pl.BlockSpec((tile, d_in_p), batched),          # state tile
            pl.BlockSpec((d_in_p, HIDDEN_P), resident),     # w1
            pl.BlockSpec((1, HIDDEN_P), resident),          # b1
            pl.BlockSpec((HIDDEN_P, HIDDEN_P), resident),   # w2
            pl.BlockSpec((1, HIDDEN_P), resident),          # b2
            pl.BlockSpec((HIDDEN_P, HIDDEN_P), resident),   # w3
            pl.BlockSpec((1, HIDDEN_P), resident),          # b3
            pl.BlockSpec((HIDDEN_P, 2 * out_p), resident),  # fused head weight
            pl.BlockSpec((1, 2 * out_p), resident),         # fused head bias
        ],
        out_specs=(
            pl.BlockSpec((tile, out_p), batched),
            pl.BlockSpec((tile, out_p), batched),
        ),
        compiler_params=pltpu.CompilerParams(
            dimension_semantics=("parallel",)),             # megacore sharding on v7x
        cost_estimate=pl.CostEstimate(
            flops=flops,
            transcendentals=batch_p * out_p,
            bytes_accessed=bytes_accessed),
    )(
        x,
        params["w1"], params["b1"],
        params["w2"], params["b2"],
        params["w3"], params["b3"],
        params["wh"], params["bh"],
    )

    return mean_p[:batch, :output_dim], std_p[:batch, :output_dim]


# ---------------------------------------------------------------------------
# Parameter construction (mirrors _weight_init: xavier_uniform weights, zero biases)
# ---------------------------------------------------------------------------
def xavier_uniform(key, fan_in, fan_out, dtype=jnp.float32):
    bound = (6.0 / (fan_in + fan_out)) ** 0.5
    return jax.random.uniform(key, (fan_in, fan_out), dtype, minval=-bound, maxval=bound)


def init_raw_params(key, input_dim, output_dim):
    ks = jax.random.split(key, 5)
    return {
        "w1": xavier_uniform(ks[0], input_dim, HIDDEN),
        "b1": jnp.zeros((1, HIDDEN), jnp.float32),
        "w2": xavier_uniform(ks[1], HIDDEN, HIDDEN),
        "b2": jnp.zeros((1, HIDDEN), jnp.float32),
        "w3": xavier_uniform(ks[2], HIDDEN, HIDDEN),
        "b3": jnp.zeros((1, HIDDEN), jnp.float32),
        "wm": xavier_uniform(ks[3], HIDDEN, output_dim),
        "bm": jnp.zeros((1, output_dim), jnp.float32),
        "ws": xavier_uniform(ks[4], HIDDEN, output_dim),
        "bs": jnp.zeros((1, output_dim), jnp.float32),
    }


def prepare_params(raw, param_dtype=jnp.float32):
    """One-time zero-padding to TPU tiles + fusion of the mean/log_std heads.

    param_dtype=jnp.bfloat16 halves weight bytes on v6e/v7x (f32 accumulation kept).
    Biases stay f32 so all VPU/EUP elementwise math remains f32 (v5e-friendly).
    """
    d_in = raw["w1"].shape[0]
    out = raw["wm"].shape[1]
    d_in_p = _round_up(d_in, SUBLANE)
    out_p = _round_up(out, LANE)

    def pad(a, rows, cols):
        return jnp.pad(a, ((0, rows - a.shape[0]), (0, cols - a.shape[1])))

    wh = jnp.concatenate([pad(raw["wm"], HIDDEN, out_p),
                          pad(raw["ws"], HIDDEN, out_p)], axis=1)
    bh = jnp.concatenate([pad(raw["bm"], 1, out_p),
                          pad(raw["bs"], 1, out_p)], axis=1)
    return {
        "w1": pad(raw["w1"], d_in_p, HIDDEN_P).astype(param_dtype),
        "b1": pad(raw["b1"], 1, HIDDEN_P),
        "w2": pad(raw["w2"], HIDDEN_P, HIDDEN_P).astype(param_dtype),
        "b2": pad(raw["b2"], 1, HIDDEN_P),
        "w3": pad(raw["w3"], HIDDEN_P, HIDDEN_P).astype(param_dtype),
        "b3": pad(raw["b3"], 1, HIDDEN_P),
        "wh": pad(wh, HIDDEN_P, 2 * out_p).astype(param_dtype),
        "bh": bh,
    }


# ---------------------------------------------------------------------------
# Pure-JAX reference (unpadded) for correctness
# ---------------------------------------------------------------------------
def reference_forward(state, raw):
    h1 = jnp.maximum(state @ raw["w1"] + raw["b1"], 0.0)
    h2 = jnp.maximum(h1 @ raw["w2"] + raw["b2"], 0.0)
    feats = h2 @ raw["w3"] + raw["b3"]
    mean = feats @ raw["wm"] + raw["bm"]
    log_std = jnp.clip(feats @ raw["ws"] + raw["bs"], LOG_STD_MIN, LOG_STD_MAX)
    return mean, jnp.exp(log_std)


if __name__ == "__main__":
    key = jax.random.PRNGKey(0)
    k_in, k_params = jax.random.split(key)

    batch, input_dim, output_dim = 8, 32, 8
    state = jax.random.normal(k_in, (batch, input_dim), jnp.float32)

    raw = init_raw_params(k_params, input_dim, output_dim)
    # param_dtype=jnp.bfloat16 is the recommended setting on v6e/v7x; f32 here so the
    # numerical check against the f32 reference is exact-ish.
    params = prepare_params(raw, param_dtype=jnp.float32)

    mean, std = policy_forward(state, params, output_dim=output_dim)
    jax.block_until_ready((mean, std))

    ref_mean, ref_std = reference_forward(state, raw)
    assert mean.shape == (batch, output_dim) and std.shape == (batch, output_dim)
    assert jnp.allclose(mean, ref_mean, atol=1e-4, rtol=1e-4)
    assert jnp.allclose(std, ref_std, atol=1e-4, rtol=1e-4)

    # TODO(synk): Normal(mean, std).sample() (random sampling) is left to the caller
    # in plain JAX: mean + std * jax.random.normal(key, mean.shape).
    print("KERNEL_OK")
</pallas_src>

<mosaic_0001>
module attributes {stable_mosaic.version = 11 : i64} {
  func.func @_policy_kernel(%arg0: i32, %arg1: memref<8x32xf32, #tpu.memory_space<vmem>>, %arg2: memref<32x128xf32, #tpu.memory_space<vmem>>, %arg3: memref<1x128xf32, #tpu.memory_space<vmem>>, %arg4: memref<128x128xf32, #tpu.memory_space<vmem>>, %arg5: memref<1x128xf32, #tpu.memory_space<vmem>>, %arg6: memref<128x128xf32, #tpu.memory_space<vmem>>, %arg7: memref<1x128xf32, #tpu.memory_space<vmem>>, %arg8: memref<128x256xf32, #tpu.memory_space<vmem>>, %arg9: memref<1x256xf32, #tpu.memory_space<vmem>>, %arg10: memref<8x128xf32, #tpu.memory_space<vmem>>, %arg11: memref<8x128xf32, #tpu.memory_space<vmem>>) attributes {dimension_semantics = [#tpu.dimension_semantics<parallel>], iteration_bounds = array<i64: 1>, scalar_prefetch = 0 : i64, scratch_operands = 0 : i64, tpu.core_type = #tpu.core_type<tc>, window_params = [{transform_indices = @transform_0, window_bounds = array<i64: 8, 32>}, {pipeline_mode = #tpu.pipeline_mode<synchronous>, transform_indices = @transform_1, window_bounds = array<i64: 32, 128>}, {pipeline_mode = #tpu.pipeline_mode<synchronous>, transform_indices = @transform_2, window_bounds = array<i64: 1, 128>}, {pipeline_mode = #tpu.pipeline_mode<synchronous>, transform_indices = @transform_3, window_bounds = array<i64: 128, 128>}, {pipeline_mode = #tpu.pipeline_mode<synchronous>, transform_indices = @transform_4, window_bounds = array<i64: 1, 128>}, {pipeline_mode = #tpu.pipeline_mode<synchronous>, transform_indices = @transform_5, window_bounds = array<i64: 128, 128>}, {pipeline_mode = #tpu.pipeline_mode<synchronous>, transform_indices = @transform_6, window_bounds = array<i64: 1, 128>}, {pipeline_mode = #tpu.pipeline_mode<synchronous>, transform_indices = @transform_7, window_bounds = array<i64: 128, 256>}, {pipeline_mode = #tpu.pipeline_mode<synchronous>, transform_indices = @transform_8, window_bounds = array<i64: 1, 256>}, {transform_indices = @transform_9, window_bounds = array<i64: 8, 128>}, {transform_indices = @transform_10, window_bounds = array<i64: 8, 128>}]} {
    %c0 = arith.constant 0 : index
    %c0_0 = arith.constant 0 : index
    %0 = vector.load %arg1[%c0, %c0_0] : memref<8x32xf32, #tpu.memory_space<vmem>>, vector<8x32xf32>
    %c0_1 = arith.constant 0 : index
    %c0_2 = arith.constant 0 : index
    %1 = vector.load %arg2[%c0_1, %c0_2] : memref<32x128xf32, #tpu.memory_space<vmem>>, vector<32x128xf32>
    %cst = arith.constant dense<0.000000e+00> : vector<8x128xf32>
    %2 = tpu.matmul %0, %1, %cst {dimension_numbers = #tpu.dot_dimension_numbers<[1], [0], [0], [1], [0, 0, 1, 1], [], []>} : vector<8x32xf32>, vector<32x128xf32>, vector<8x128xf32> -> vector<8x128xf32>
    %c0_3 = arith.constant 0 : index
    %c0_4 = arith.constant 0 : index
    %3 = vector.load %arg3[%c0_3, %c0_4] : memref<1x128xf32, #tpu.memory_space<vmem>>, vector<1x128xf32>
    %4 = vector.broadcast %3 : vector<1x128xf32> to vector<8x128xf32>
    %5 = arith.addf %2, %4 : vector<8x128xf32>
    %cst_5 = arith.constant 0.000000e+00 : f32
    %6 = vector.broadcast %cst_5 : f32 to vector<8x128xf32>
    %7 = arith.maximumf %5, %6 : vector<8x128xf32>
    %c0_6 = arith.constant 0 : index
    %c0_7 = arith.constant 0 : index
    %8 = vector.load %arg4[%c0_6, %c0_7] : memref<128x128xf32, #tpu.memory_space<vmem>>, vector<128x128xf32>
    %cst_8 = arith.constant dense<0.000000e+00> : vector<8x128xf32>
    %9 = tpu.matmul %7, %8, %cst_8 {dimension_numbers = #tpu.dot_dimension_numbers<[1], [0], [0], [1], [0, 0, 1, 1], [], []>} : vector<8x128xf32>, vector<128x128xf32>, vector<8x128xf32> -> vector<8x128xf32>
    %c0_9 = arith.constant 0 : index
    %c0_10 = arith.constant 0 : index
    %10 = vector.load %arg5[%c0_9, %c0_10] : memref<1x128xf32, #tpu.memory_space<vmem>>, vector<1x128xf32>
    %11 = vector.broadcast %10 : vector<1x128xf32> to vector<8x128xf32>
    %12 = arith.addf %9, %11 : vector<8x128xf32>
    %cst_11 = arith.constant 0.000000e+00 : f32
    %13 = vector.broadcast %cst_11 : f32 to vector<8x128xf32>
    %14 = arith.maximumf %12, %13 : vector<8x128xf32>
    %c0_12 = arith.constant 0 : index
    %c0_13 = arith.constant 0 : index
    %15 = vector.load %arg6[%c0_12, %c0_13] : memref<128x128xf32, #tpu.memory_space<vmem>>, vector<128x128xf32>
    %cst_14 = arith.constant dense<0.000000e+00> : vector<8x128xf32>
    %16 = tpu.matmul %14, %15, %cst_14 {dimension_numbers = #tpu.dot_dimension_numbers<[1], [0], [0], [1], [0, 0, 1, 1], [], []>} : vector<8x128xf32>, vector<128x128xf32>, vector<8x128xf32> -> vector<8x128xf32>
    %c0_15 = arith.constant 0 : index
    %c0_16 = arith.constant 0 : index
    %17 = vector.load %arg7[%c0_15, %c0_16] : memref<1x128xf32, #tpu.memory_space<vmem>>, vector<1x128xf32>
    %18 = vector.broadcast %17 : vector<1x128xf32> to vector<8x128xf32>
    %19 = arith.addf %16, %18 : vector<8x128xf32>
    %c0_17 = arith.constant 0 : index
    %c0_18 = arith.constant 0 : index
    %20 = vector.load %arg8[%c0_17, %c0_18] : memref<128x256xf32, #tpu.memory_space<vmem>>, vector<128x256xf32>
    %cst_19 = arith.constant dense<0.000000e+00> : vector<8x256xf32>
    %21 = tpu.matmul %19, %20, %cst_19 {dimension_numbers = #tpu.dot_dimension_numbers<[1], [0], [0], [1], [0, 0, 1, 1], [], []>} : vector<8x128xf32>, vector<128x256xf32>, vector<8x256xf32> -> vector<8x256xf32>
    %c0_20 = arith.constant 0 : index
    %c0_21 = arith.constant 0 : index
    %22 = vector.load %arg9[%c0_20, %c0_21] : memref<1x256xf32, #tpu.memory_space<vmem>>, vector<1x256xf32>
    %23 = vector.broadcast %22 : vector<1x256xf32> to vector<8x256xf32>
    %24 = arith.addf %21, %23 : vector<8x256xf32>
    %25 = vector.extract_strided_slice %24 {offsets = [0, 0], sizes = [8, 128], strides = [1, 1]} : vector<8x256xf32> to vector<8x128xf32>
    %26 = vector.extract_strided_slice %24 {offsets = [0, 128], sizes = [8, 128], strides = [1, 1]} : vector<8x256xf32> to vector<8x128xf32>
    %cst_22 = arith.constant -2.000000e+01 : f32
    %cst_23 = arith.constant 2.000000e+00 : f32
    %27 = vector.broadcast %cst_22 : f32 to vector<8x128xf32>
    %28 = arith.maximumf %27, %26 : vector<8x128xf32>
    %29 = vector.broadcast %cst_23 : f32 to vector<8x128xf32>
    %30 = arith.minimumf %29, %28 : vector<8x128xf32>
    %c0_24 = arith.constant 0 : index
    %c0_25 = arith.constant 0 : index
    %31 = vector.load %arg10[%c0_24, %c0_25] : memref<8x128xf32, #tpu.memory_space<vmem>>, vector<8x128xf32>
    tpu.vector_store %arg10[%c0_24, %c0_25], %25 {strides = array<i32>} : memref<8x128xf32, #tpu.memory_space<vmem>>, vector<8x128xf32>,
    %32 = math.exp %30 : vector<8x128xf32>
    %c0_26 = arith.constant 0 : index
    %c0_27 = arith.constant 0 : index
    %33 = vector.load %arg11[%c0_26, %c0_27] : memref<8x128xf32, #tpu.memory_space<vmem>>, vector<8x128xf32>
    tpu.vector_store %arg11[%c0_26, %c0_27], %32 {strides = array<i32>} : memref<8x128xf32, #tpu.memory_space<vmem>>, vector<8x128xf32>,
    return
  }
  func.func @transform_0(%arg0: i32) -> (i32, i32) {
    %c0_i32 = arith.constant 0 : i32
    %c0_i32_0 = arith.constant 0 : i32
    return %arg0, %c0_i32 : i32, i32
  }
  func.func @transform_1(%arg0: i32) -> (i32, i32) {
    %c0_i32 = arith.constant 0 : i32
    %c0_i32_0 = arith.constant 0 : i32
    %c0_i32_1 = arith.constant 0 : i32
    return %c0_i32, %c0_i32_0 : i32, i32
  }
  func.func @transform_2(%arg0: i32) -> (i32, i32) {
    %c0_i32 = arith.constant 0 : i32
    %c0_i32_0 = arith.constant 0 : i32
    %c0_i32_1 = arith.constant 0 : i32
    return %c0_i32, %c0_i32_0 : i32, i32
  }
  func.func @transform_3(%arg0: i32) -> (i32, i32) {
    %c0_i32 = arith.constant 0 : i32
    %c0_i32_0 = arith.constant 0 : i32
    %c0_i32_1 = arith.constant 0 : i32
    return %c0_i32, %c0_i32_0 : i32, i32
  }
  func.func @transform_4(%arg0: i32) -> (i32, i32) {
    %c0_i32 = arith.constant 0 : i32
    %c0_i32_0 = arith.constant 0 : i32
    %c0_i32_1 = arith.constant 0 : i32
    return %c0_i32, %c0_i32_0 : i32, i32
  }
  func.func @transform_5(%arg0: i32) -> (i32, i32) {
    %c0_i32 = arith.constant 0 : i32
    %c0_i32_0 = arith.constant 0 : i32
    %c0_i32_1 = arith.constant 0 : i32
    return %c0_i32, %c0_i32_0 : i32, i32
  }
  func.func @transform_6(%arg0: i32) -> (i32, i32) {
    %c0_i32 = arith.constant 0 : i32
    %c0_i32_0 = arith.constant 0 : i32
    %c0_i32_1 = arith.constant 0 : i32
    return %c0_i32, %c0_i32_0 : i32, i32
  }
  func.func @transform_7(%arg0: i32) -> (i32, i32) {
    %c0_i32 = arith.constant 0 : i32
    %c0_i32_0 = arith.constant 0 : i32
    %c0_i32_1 = arith.constant 0 : i32
    return %c0_i32, %c0_i32_0 : i32, i32
  }
  func.func @transform_8(%arg0: i32) -> (i32, i32) {
    %c0_i32 = arith.constant 0 : i32
    %c0_i32_0 = arith.constant 0 : i32
    %c0_i32_1 = arith.constant 0 : i32
    return %c0_i32, %c0_i32_0 : i32, i32
  }
  func.func @transform_9(%arg0: i32) -> (i32, i32) {
    %c0_i32 = arith.constant 0 : i32
    %c0_i32_0 = arith.constant 0 : i32
    return %arg0, %c0_i32 : i32, i32
  }
  func.func @transform_10(%arg0: i32) -> (i32, i32) {
    %c0_i32 = arith.constant 0 : i32
    %c0_i32_0 = arith.constant 0 : i32
    return %arg0, %c0_i32 : i32, i32
  }
}

</mosaic_0001>

<llo_original>
// kernel: policy_forward.1
$region0: #{policy_forward.1}
  #allocation0 [shape = 'u32[]', space=smem, size = 0x4, offset = 0x4, fixed_abs, tag = 'smem constant byte address 0x4 - core index']
  #allocation1 [shape = 'u32[144,128]{1,0:T(1,128)}', space=vmem, size = 0x12000, scoped, tag = 'internal scratch']
  %s0 = inlined_call_operand.hbm [shape: f32[8,32], index: 0, kind: input, shape index: {}]
  %s1 = inlined_call_operand.hbm [shape: f32[32,128], index: 1, kind: input, shape index: {}]
  %s2 = inlined_call_operand.vmem [shape: f32[1,128], index: 2, kind: input, shape index: {}]
  %s3 = inlined_call_operand.hbm [shape: f32[128,128], index: 3, kind: input, shape index: {}]
  %s4 = inlined_call_operand.vmem [shape: f32[1,128], index: 4, kind: input, shape index: {}]
  %s5 = inlined_call_operand.hbm [shape: f32[128,128], index: 5, kind: input, shape index: {}]
  %s6 = inlined_call_operand.vmem [shape: f32[1,128], index: 6, kind: input, shape index: {}]
  %s7 = inlined_call_operand.hbm [shape: f32[128,256], index: 7, kind: input, shape index: {}]
  %s8 = inlined_call_operand.vmem [shape: f32[1,256], index: 8, kind: input, shape index: {}]
  %s9 = inlined_call_operand.hbm [shape: f32[8,128], index: 9, kind: output, shape index: {0}]
  %s10 = inlined_call_operand.hbm [shape: f32[8,128], index: 10, kind: output, shape index: {1}]
  %11 = xla_tuple %s9, %s10
  %s12 = sld [smem:[#allocation0]]
  $region74: #{policy_forward.1} parent=0
    _
  %s14 = ssub.s32 1, %s12
  %s15 = scalar_select 0, %s14, %s12
  $region1: #{policy_forward.1} parent=0
    #allocation2 [shape = 'u8[4096]{0}', space=vmem, size = 0x1000, scoped, tag = 'input window, operand 0, single buffered']
    #allocation3 [shape = 's32[1]{0}', space=sflag, size = 0x4, scoped, tag = 'scoped memory for policy_forward.1']
    #allocation4 [shape = 's32[1]{0}', space=sflag, size = 0x4, scoped, tag = 'scoped memory for policy_forward.1']
    #allocation5 [shape = 'u8[16384]{0}', space=vmem, size = 0x4000, scoped, tag = 'input window, operand 1, single buffered']
    #allocation6 [shape = 's32[1]{0}', space=sflag, size = 0x4, scoped, tag = 'scoped memory for policy_forward.1']
    #allocation7 [shape = 'u8[65536]{0}', space=vmem, size = 0x10000, scoped, tag = 'input window, operand 3, single buffered']
    #allocation8 [shape = 'u8[65536]{0}', space=vmem, size = 0x10000, scoped, tag = 'input window, operand 5, single buffered']
    #allocation9 [shape = 's32[1]{0}', space=sflag, size = 0x4, scoped, tag = 'scoped memory for policy_forward.1']
    #allocation10 [shape = 'u8[131072]{0}', space=vmem, size = 0x20000, scoped, tag = 'input window, operand 7, single buffered']
    #allocation11 [shape = 'u8[4096]{0}', space=vmem, size = 0x1000, scoped, tag = 'output window, operand 0, single buffered']
    #allocation12 [shape = 'u8[4096]{0}', space=vmem, size = 0x1000, scoped, tag = 'output window, operand 1, single buffered']
    #allocation13 [shape = 's32[1]{0}', space=sflag, size = 0x4, scoped, tag = 'scoped memory for policy_forward.1']
    %16 = vsyncpa [#allocation3], 0
    %17 = vsyncpa [#allocation6], 0
    %18 = vsyncpa [#allocation9], 0
    %19 = vsyncpa [#allocation4], 0
    %20 = vsyncpa [#allocation13], 0
    // Predicated region
    $region2: #{policy_forward.1} parent=1 // pred_check
      _
    $region3: #{policy_forward.1} parent=1 // pred_check_branch
      %22 = sbr.rel (0) target = $region5
    $region4: #{policy_forward.1} parent=1 // pred_region
      %s24 = ssub.s32 128, 128
      %25 = vsyncadd [#allocation3], %s24
      %s27 = sshll.u32 [#allocation2], 4
      %s28 = int_to_ptr.vmem [resolvable:$true] %s27
      %30 = dma.hbm_to_vmem [thread:$0]  %s0, 128, %s28, [#allocation3]
    $region5: #{policy_forward.1} parent=1 // pred_fallthru
      _
    // Predicated region
    $region6: #{policy_forward.1} parent=1 // pred_check
      _
    $region7: #{policy_forward.1} parent=1 // pred_check_branch
      %32 = sbr.rel (0) target = $region9
    $region8: #{policy_forward.1} parent=1 // pred_region
      %s34 = ssub.s32 512, 512
      %35 = vsyncadd [#allocation6], %s34
      %s36 = sshll.u32 [#allocation5], 4
      %s37 = int_to_ptr.vmem [resolvable:$true] %s36
      %42 = dma.hbm_to_vmem [thread:$0]  %s1, 512, %s37, [#allocation6], 128, 128, 8
    $region9: #{policy_forward.1} parent=1 // pred_fallthru
      _
    // Predicated region
    $region10: #{policy_forward.1} parent=1 // pred_check
      _
    $region11: #{policy_forward.1} parent=1 // pred_check_branch
      %44 = sbr.rel (0) target = $region13
    $region12: #{policy_forward.1} parent=1 // pred_region
      _
    $region13: #{policy_forward.1} parent=1 // pred_fallthru
      _
    // Predicated region
    $region14: #{policy_forward.1} parent=1 // pred_check
      _
    $region15: #{policy_forward.1} parent=1 // pred_check_branch
      %46 = sbr.rel (0) target = $region17
    $region16: #{policy_forward.1} parent=1 // pred_region
      %s48 = ssub.s32 2048, 2048
      %49 = vsyncadd [#allocation6], %s48
      %s50 = sshll.u32 [#allocation7], 4
      %s51 = int_to_ptr.vmem [resolvable:$true] %s50
      %56 = dma.hbm_to_vmem [thread:$0]  %s3, 2048, %s51, [#allocation6], 128, 128, 8
    $region17: #{policy_forward.1} parent=1 // pred_fallthru
      _
    // Predicated region
    $region18: #{policy_forward.1} parent=1 // pred_check
      _
    $region19: #{policy_forward.1} parent=1 // pred_check_branch
      %58 = sbr.rel (0) target = $region21
    $region20: #{policy_forward.1} parent=1 // pred_region
      _
    $region21: #{policy_forward.1} parent=1 // pred_fallthru
      _
    // Predicated region
    $region22: #{policy_forward.1} parent=1 // pred_check
      _
    $region23: #{policy_forward.1} parent=1 // pred_check_branch
      %60 = sbr.rel (0) target = $region25
    $region24: #{policy_forward.1} parent=1 // pred_region
      %s62 = ssub.s32 2048, 2048
      %63 = vsyncadd [#allocation9], %s62
      %s64 = sshll.u32 [#allocation8], 4
      %s65 = int_to_ptr.vmem [resolvable:$true] %s64
      %70 = dma.hbm_to_vmem [thread:$0]  %s5, 2048, %s65, [#allocation9], 128, 128, 8
    $region25: #{policy_forward.1} parent=1 // pred_fallthru
      _
    // Predicated region
    $region26: #{policy_forward.1} parent=1 // pred_check
      _
    $region27: #{policy_forward.1} parent=1 // pred_check_branch
      %72 = sbr.rel (0) target = $region29
    $region28: #{policy_forward.1} parent=1 // pred_region
      _
    $region29: #{policy_forward.1} parent=1 // pred_fallthru
      _
    // Predicated region
    $region30: #{policy_forward.1} parent=1 // pred_check
      _
    $region31: #{policy_forward.1} parent=1 // pred_check_branch
      %74 = sbr.rel (0) target = $region33
    $region32: #{policy_forward.1} parent=1 // pred_region
      %s76 = ssub.s32 4096, 4096
      %77 = vsyncadd [#allocation9], %s76
      %s78 = sshll.u32 [#allocation10], 4
      %s79 = int_to_ptr.vmem [resolvable:$true] %s78
      %84 = dma.hbm_to_vmem [thread:$0]  %s7, 4096, %s79, [#allocation9], 256, 256, 16
    $region33: #{policy_forward.1} parent=1 // pred_fallthru
      _
    // Predicated region
    $region34: #{policy_forward.1} parent=1 // pred_check
      _
    $region35: #{policy_forward.1} parent=1 // pred_check_branch
      %86 = sbr.rel (0) target = $region37
    $region36: #{policy_forward.1} parent=1 // pred_region
      _
    $region37: #{policy_forward.1} parent=1 // pred_fallthru
      _
    // Predicated region
    $region38: #{policy_forward.1} parent=1 // pred_check
      _
    $region39: #{policy_forward.1} parent=1 // pred_check_branch
      %88 = sbr.rel (0) target = $region41
    $region40: #{policy_forward.1} parent=1 // pred_region
      %89 = dma.done [#allocation3], 128
    $region41: #{policy_forward.1} parent=1 // pred_fallthru
      _
    // Predicated region
    $region42: #{policy_forward.1} parent=1 // pred_check
      _
    $region43: #{policy_forward.1} parent=1 // pred_check_branch
      %91 = sbr.rel (0) target = $region45
    $region44: #{policy_forward.1} parent=1 // pred_region
      %92 = dma.done [#allocation6], 512
    $region45: #{policy_forward.1} parent=1 // pred_fallthru
      _
    // Predicated region
    $region46: #{policy_forward.1} parent=1 // pred_check
      _
    $region47: #{policy_forward.1} parent=1 // pred_check_branch
      %94 = sbr.rel (0) target = $region49
    $region48: #{policy_forward.1} parent=1 // pred_region
      %95 = dma.done [#allocation6], 2048
    $region49: #{policy_forward.1} parent=1 // pred_fallthru
      _
    // Predicated region
    $region50: #{policy_forward.1} parent=1 // pred_check
      _
    $region51: #{policy_forward.1} parent=1 // pred_check_branch
      %97 = sbr.rel (0) target = $region53
    $region52: #{policy_forward.1} parent=1 // pred_region
      %98 = dma.done [#allocation9], 2048
    $region53: #{policy_forward.1} parent=1 // pred_fallthru
      _
    // Predicated region
    $region54: #{policy_forward.1} parent=1 // pred_check
      _
    $region55: #{policy_forward.1} parent=1 // pred_check_branch
      %100 = sbr.rel (0) target = $region57
    $region56: #{policy_forward.1} parent=1 // pred_region
      %101 = dma.done [#allocation9], 4096
    $region57: #{policy_forward.1} parent=1 // pred_fallthru
      _
    %v102 = vld [vmem:[#allocation2] sm:$0xff]
    %v103 = vld [vmem:[#allocation5] sm:$0xff]
    %v104 = vld [vmem:[#allocation5 + $0x8] sm:$0xff]
    %v105 = vld [vmem:[#allocation5 + $0x10] sm:$0xff]
    %v106 = vld [vmem:[#allocation5 + $0x18] sm:$0xff]
    %v107 = vld [vmem:[%s2] sm:$0x1]
    %v109 = vlaneseq
    %v110 = vshrl.u32 %v109, 7
    %v111 = vsub.s32 0, %v110
    %v112 = vrot.slane %v107, %v111
    %vm114 = vcmask 261120
    %v116 = vsel %vm114, %v102, 0
    %118 = vmatprep.subr.mxu0 0.0
    %119 = vmatpush1.msra.mxu0 %v103
    %120 = vmatprep.subr.mxu0 0.0
    %121 = vmatpush1.msra.mxu0 %v104
    %122 = vmatprep.subr.mxu0 0.0
    %123 = vmatpush1.msra.mxu0 %v105
    %124 = vmatprep.subr.mxu0 0.0
    %125 = vmatpush1.msra.mxu0 %v106
    %126 = vmatprep.subr.mxu0 0.0
    %127 = vmatpush1.msra.mxu0 0.0
    %128 = vmatprep.subr.mxu0 0.0
    %129 = vmatpush1.msra.mxu0 0.0
    %130 = vmatprep.subr.mxu0 0.0
    %131 = vmatpush1.msra.mxu0 0.0
    %132 = vmatprep.subr.mxu0 0.0
    %133 = vmatpush1.msra.mxu0 0.0
    %134 = vmatprep.subr.mxu0 0.0
    %135 = vmatpush1.msra.mxu0 0.0
    %136 = vmatprep.subr.mxu0 0.0
    %137 = vmatpush1.msra.mxu0 0.0
    %138 = vmatprep.subr.mxu0 0.0
    %139 = vmatpush1.msra.mxu0 0.0
    %140 = vmatprep.subr.mxu0 0.0
    %141 = vmatpush1.msra.mxu0 0.0
    %142 = vmatprep.subr.mxu0 0.0
    %143 = vmatpush1.msra.mxu0 0.0
    %144 = vmatprep.subr.mxu0 0.0
    %145 = vmatpush1.msra.mxu0 0.0
    %146 = vmatprep.subr.mxu0 0.0
    %147 = vmatpush1.msra.mxu0 0.0
    %148 = vmatprep.subr.mxu0 0.0
    %149 = vmatpush1.msra.mxu0 0.0
    %150 = vmatprep.subr.mxu0 0.0
    %151 = vmatpush1.msra.mxu0 0.0
    %152 = vmatprep.subr.mxu0 0.0
    %153 = vmatpush1.msra.mxu0 0.0
    %154 = vmatprep.subr.mxu0 0.0
    %155 = vmatpush1.msra.mxu0 0.0
    %156 = vmatprep.subr.mxu0 0.0
    %157 = vmatpush1.msra.mxu0 0.0
    %158 = vmatprep.subr.mxu0 0.0
    %159 = vmatpush1.msra.mxu0 0.0
    %160 = vmatprep.subr.mxu0 0.0
    %161 = vmatpush1.msra.mxu0 0.0
    %162 = vmatprep.subr.mxu0 0.0
    %163 = vmatpush1.msra.mxu0 0.0
    %164 = vmatprep.subr.mxu0 0.0
    %165 = vmatpush1.msra.mxu0 0.0
    %166 = vmatprep.subr.mxu0 0.0
    %167 = vmatpush1.msra.mxu0 0.0
    %168 = vmatprep.subr.mxu0 0.0
    %169 = vmatpush1.msra.mxu0 0.0
    %170 = vmatprep.subr.mxu0 0.0
    %171 = vmatpush1.msra.mxu0 0.0
    %172 = vmatprep.subr.mxu0 0.0
    %173 = vmatpush1.msra.mxu0 0.0
    %174 = vmatprep.subr.mxu0 0.0
    %175 = vmatpush1.msra.mxu0 0.0
    %176 = vmatprep.subr.mxu0 0.0
    %177 = vmatpush1.msra.mxu0 0.0
    %178 = vmatprep.subr.mxu0 0.0
    %179 = vmatpush1.msra.mxu0 0.0
    %180 = vmatprep.subr.mxu0 0.0
    %181 = vmatpush1.msra.mxu0 0.0
    %182 = vmatprep.mubr.f32.mxu0 0.0
    %183 = vmatmul.mubr.f32.gmra.mrb[0].mxu0 %v116
    %v184 = vpop.f32.mrb[0].mxu0
    %v185 = vadd.f32 %v112, %v184
    %v186 = vpop.f32.mrb[0].mxu0
    %187 = vdwg.mxu0
    %v188 = vmax.f32 %v185, 0.0
    %v189 = vld [vmem:[#allocation7] sm:$0xff]
    %v190 = vld [vmem:[#allocation7 + $0x8] sm:$0xff]
    %v191 = vld [vmem:[#allocation7 + $0x10] sm:$0xff]
    %v192 = vld [vmem:[#allocation7 + $0x18] sm:$0xff]
    %v193 = vld [vmem:[#allocation7 + $0x20] sm:$0xff]
    %v194 = vld [vmem:[#allocation7 + $0x28] sm:$0xff]
    %v195 = vld [vmem:[#allocation7 + $0x30] sm:$0xff]
    %v196 = vld [vmem:[#allocation7 + $0x38] sm:$0xff]
    %v197 = vld [vmem:[#allocation7 + $0x40] sm:$0xff]
    %v198 = vld [vmem:[#allocation7 + $0x48] sm:$0xff]
    %v199 = vld [vmem:[#allocation7 + $0x50] sm:$0xff]
    %v200 = vld [vmem:[#allocation7 + $0x58] sm:$0xff]
    %v201 = vld [vmem:[#allocation7 + $0x60] sm:$0xff]
    %v202 = vld [vmem:[#allocation7 + $0x68] sm:$0xff]
    %v203 = vld [vmem:[#allocation7 + $0x70] sm:$0xff]
    %v204 = vld [vmem:[#allocation7 + $0x78] sm:$0xff]
    %v205 = vld [vmem:[%s4] sm:$0x1]
    %v207 = vlaneseq
    %v208 = vshrl.u32 %v207, 7
    %v209 = vsub.s32 0, %v208
    %v210 = vrot.slane %v205, %v209
    %212 = vmatprep.subr.mxu0 0.0
    %213 = vmatpush1.msra.mxu0 %v189
    %214 = vmatprep.subr.mxu0 0.0
    %215 = vmatpush1.msra.mxu0 %v190
    %216 = vmatprep.subr.mxu0 0.0
    %217 = vmatpush1.msra.mxu0 %v191
    %218 = vmatprep.subr.mxu0 0.0
    %219 = vmatpush1.msra.mxu0 %v192
    %220 = vmatprep.subr.mxu0 0.0
    %221 = vmatpush1.msra.mxu0 %v193
    %222 = vmatprep.subr.mxu0 0.0
    %223 = vmatpush1.msra.mxu0 %v194
    %224 = vmatprep.subr.mxu0 0.0
    %225 = vmatpush1.msra.mxu0 %v195
    %226 = vmatprep.subr.mxu0 0.0
    %227 = vmatpush1.msra.mxu0 %v196
    %228 = vmatprep.subr.mxu0 0.0
    %229 = vmatpush1.msra.mxu0 %v197
    %230 = vmatprep.subr.mxu0 0.0
    %231 = vmatpush1.msra.mxu0 %v198
    %232 = vmatprep.subr.mxu0 0.0
    %233 = vmatpush1.msra.mxu0 %v199
    %234 = vmatprep.subr.mxu0 0.0
    %235 = vmatpush1.msra.mxu0 %v200
    %236 = vmatprep.subr.mxu0 0.0
    %237 = vmatpush1.msra.mxu0 %v201
    %238 = vmatprep.subr.mxu0 0.0
    %239 = vmatpush1.msra.mxu0 %v202
    %240 = vmatprep.subr.mxu0 0.0
    %241 = vmatpush1.msra.mxu0 %v203
    %242 = vmatprep.subr.mxu0 0.0
    %243 = vmatpush1.msra.mxu0 %v204
    %244 = vmatprep.subr.mxu0 0.0
    %245 = vmatpush1.msra.mxu0 0.0
    %246 = vmatprep.subr.mxu0 0.0
    %247 = vmatpush1.msra.mxu0 0.0
    %248 = vmatprep.subr.mxu0 0.0
    %249 = vmatpush1.msra.mxu0 0.0
    %250 = vmatprep.subr.mxu0 0.0
    %251 = vmatpush1.msra.mxu0 0.0
    %252 = vmatprep.subr.mxu0 0.0
    %253 = vmatpush1.msra.mxu0 0.0
    %254 = vmatprep.subr.mxu0 0.0
    %255 = vmatpush1.msra.mxu0 0.0
    %256 = vmatprep.subr.mxu0 0.0
    %257 = vmatpush1.msra.mxu0 0.0
    %258 = vmatprep.subr.mxu0 0.0
    %259 = vmatpush1.msra.mxu0 0.0
    %260 = vmatprep.subr.mxu0 0.0
    %261 = vmatpush1.msra.mxu0 0.0
    %262 = vmatprep.subr.mxu0 0.0
    %263 = vmatpush1.msra.mxu0 0.0
    %264 = vmatprep.subr.mxu0 0.0
    %265 = vmatpush1.msra.mxu0 0.0
    %266 = vmatprep.subr.mxu0 0.0
    %267 = vmatpush1.msra.mxu0 0.0
    %268 = vmatprep.subr.mxu0 0.0
    %269 = vmatpush1.msra.mxu0 0.0
    %270 = vmatprep.subr.mxu0 0.0
    %271 = vmatpush1.msra.mxu0 0.0
    %272 = vmatprep.subr.mxu0 0.0
    %273 = vmatpush1.msra.mxu0 0.0
    %274 = vmatprep.subr.mxu0 0.0
    %275 = vmatpush1.msra.mxu0 0.0
    %276 = vmatprep.mubr.f32.mxu0 0.0
    %277 = vmatmul.mubr.f32.gmra.mrb[0].mxu0 %v188
    %v278 = vpop.f32.mrb[0].mxu0
    %v279 = vadd.f32 %v210, %v278
    %v280 = vpop.f32.mrb[0].mxu0
    %281 = vdwg.mxu0
    %v282 = vmax.f32 %v279, 0.0
    %v283 = vld [vmem:[#allocation8] sm:$0xff]
    %v284 = vld [vmem:[#allocation8 + $0x8] sm:$0xff]
    %v285 = vld [vmem:[#allocation8 + $0x10] sm:$0xff]
    %v286 = vld [vmem:[#allocation8 + $0x18] sm:$0xff]
    %v287 = vld [vmem:[#allocation8 + $0x20] sm:$0xff]
    %v288 = vld [vmem:[#allocation8 + $0x28] sm:$0xff]
    %v289 = vld [vmem:[#allocation8 + $0x30] sm:$0xff]
    %v290 = vld [vmem:[#allocation8 + $0x38] sm:$0xff]
    %v291 = vld [vmem:[#allocation8 + $0x40] sm:$0xff]
    %v292 = vld [vmem:[#allocation8 + $0x48] sm:$0xff]
    %v293 = vld [vmem:[#allocation8 + $0x50] sm:$0xff]
    %v294 = vld [vmem:[#allocation8 + $0x58] sm:$0xff]
    %v295 = vld [vmem:[#allocation8 + $0x60] sm:$0xff]
    %v296 = vld [vmem:[#allocation8 + $0x68] sm:$0xff]
    %v297 = vld [vmem:[#allocation8 + $0x70] sm:$0xff]
    %v298 = vld [vmem:[#allocation8 + $0x78] sm:$0xff]
    %v299 = vld [vmem:[%s6] sm:$0x1]
    %v301 = vlaneseq
    %v302 = vshrl.u32 %v301, 7
    %v303 = vsub.s32 0, %v302
    %v304 = vrot.slane %v299, %v303
    %306 = vmatprep.subr.mxu0 0.0
    %307 = vmatpush1.msra.mxu0 %v283
    %308 = vmatprep.subr.mxu0 0.0
    %309 = vmatpush1.msra.mxu0 %v284
    %310 = vmatprep.subr.mxu0 0.0
    %311 = vmatpush1.msra.mxu0 %v285
    %312 = vmatprep.subr.mxu0 0.0
    %313 = vmatpush1.msra.mxu0 %v286
    %314 = vmatprep.subr.mxu0 0.0
    %315 = vmatpush1.msra.mxu0 %v287
    %316 = vmatprep.subr.mxu0 0.0
    %317 = vmatpush1.msra.mxu0 %v288
    %318 = vmatprep.subr.mxu0 0.0
    %319 = vmatpush1.msra.mxu0 %v289
    %320 = vmatprep.subr.mxu0 0.0
    %321 = vmatpush1.msra.mxu0 %v290
    %322 = vmatprep.subr.mxu0 0.0
    %323 = vmatpush1.msra.mxu0 %v291
    %324 = vmatprep.subr.mxu0 0.0
    %325 = vmatpush1.msra.mxu0 %v292
    %326 = vmatprep.subr.mxu0 0.0
    %327 = vmatpush1.msra.mxu0 %v293
    %328 = vmatprep.subr.mxu0 0.0
    %329 = vmatpush1.msra.mxu0 %v294
    %330 = vmatprep.subr.mxu0 0.0
    %331 = vmatpush1.msra.mxu0 %v295
    %332 = vmatprep.subr.mxu0 0.0
    %333 = vmatpush1.msra.mxu0 %v296
    %334 = vmatprep.subr.mxu0 0.0
    %335 = vmatpush1.msra.mxu0 %v297
    %336 = vmatprep.subr.mxu0 0.0
    %337 = vmatpush1.msra.mxu0 %v298
    %338 = vmatprep.subr.mxu0 0.0
    %339 = vmatpush1.msra.mxu0 0.0
    %340 = vmatprep.subr.mxu0 0.0
    %341 = vmatpush1.msra.mxu0 0.0
    %342 = vmatprep.subr.mxu0 0.0
    %343 = vmatpush1.msra.mxu0 0.0
    %344 = vmatprep.subr.mxu0 0.0
    %345 = vmatpush1.msra.mxu0 0.0
    %346 = vmatprep.subr.mxu0 0.0
    %347 = vmatpush1.msra.mxu0 0.0
    %348 = vmatprep.subr.mxu0 0.0
    %349 = vmatpush1.msra.mxu0 0.0
    %350 = vmatprep.subr.mxu0 0.0
    %351 = vmatpush1.msra.mxu0 0.0
    %352 = vmatprep.subr.mxu0 0.0
    %353 = vmatpush1.msra.mxu0 0.0
    %354 = vmatprep.subr.mxu0 0.0
    %355 = vmatpush1.msra.mxu0 0.0
    %356 = vmatprep.subr.mxu0 0.0
    %357 = vmatpush1.msra.mxu0 0.0
    %358 = vmatprep.subr.mxu0 0.0
    %359 = vmatpush1.msra.mxu0 0.0
    %360 = vmatprep.subr.mxu0 0.0
    %361 = vmatpush1.msra.mxu0 0.0
    %362 = vmatprep.subr.mxu0 0.0
    %363 = vmatpush1.msra.mxu0 0.0
    %364 = vmatprep.subr.mxu0 0.0
    %365 = vmatpush1.msra.mxu0 0.0
    %366 = vmatprep.subr.mxu0 0.0
    %367 = vmatpush1.msra.mxu0 0.0
    %368 = vmatprep.subr.mxu0 0.0
    %369 = vmatpush1.msra.mxu0 0.0
    %370 = vmatprep.mubr.f32.mxu0 0.0
    %371 = vmatmul.mubr.f32.gmra.mrb[0].mxu0 %v282
    %v372 = vpop.f32.mrb[0].mxu0
    %v373 = vadd.f32 %v304, %v372
    %v374 = vpop.f32.mrb[0].mxu0
    %375 = vdwg.mxu0
    %v376 = vld [vmem:[#allocation10] sm:$0xff]
    %v377 = vld [vmem:[#allocation10 + $0x8] sm:$0xff]
    %v378 = vld [vmem:[#allocation10 + $0x10] sm:$0xff]
    %v379 = vld [vmem:[#allocation10 + $0x18] sm:$0xff]
    %v380 = vld [vmem:[#allocation10 + $0x20] sm:$0xff]
    %v381 = vld [vmem:[#allocation10 + $0x28] sm:$0xff]
    %v382 = vld [vmem:[#allocation10 + $0x30] sm:$0xff]
    %v383 = vld [vmem:[#allocation10 + $0x38] sm:$0xff]
    %v384 = vld [vmem:[#allocation10 + $0x40] sm:$0xff]
    %v385 = vld [vmem:[#allocation10 + $0x48] sm:$0xff]
    %v386 = vld [vmem:[#allocation10 + $0x50] sm:$0xff]
    %v387 = vld [vmem:[#allocation10 + $0x58] sm:$0xff]
    %v388 = vld [vmem:[#allocation10 + $0x60] sm:$0xff]
    %v389 = vld [vmem:[#allocation10 + $0x68] sm:$0xff]
    %v390 = vld [vmem:[#allocation10 + $0x70] sm:$0xff]
    %v391 = vld [vmem:[#allocation10 + $0x78] sm:$0xff]
    %v392 = vld [vmem:[#allocation10 + $0x80] sm:$0xff]
    %v393 = vld [vmem:[#allocation10 + $0x88] sm:$0xff]
    %v394 = vld [vmem:[#allocation10 + $0x90] sm:$0xff]
    %v395 = vld [vmem:[#allocation10 + $0x98] sm:$0xff]
    %v396 = vld [vmem:[#allocation10 + $0xa0] sm:$0xff]
    %v397 = vld [vmem:[#allocation10 + $0xa8] sm:$0xff]
    %v398 = vld [vmem:[#allocation10 + $0xb0] sm:$0xff]
    %v399 = vld [vmem:[#allocation10 + $0xb8] sm:$0xff]
    %v400 = vld [vmem:[#allocation10 + $0xc0] sm:$0xff]
    %v401 = vld [vmem:[#allocation10 + $0xc8] sm:$0xff]
    %v402 = vld [vmem:[#allocation10 + $0xd0] sm:$0xff]
    %v403 = vld [vmem:[#allocation10 + $0xd8] sm:$0xff]
    %v404 = vld [vmem:[#allocation10 + $0xe0] sm:$0xff]
    %v405 = vld [vmem:[#allocation10 + $0xe8] sm:$0xff]
    %v406 = vld [vmem:[#allocation10 + $0xf0] sm:$0xff]
    %v407 = vld [vmem:[#allocation10 + $0xf8] sm:$0xff]
    %v408 = vld [vmem:[%s8] sm:$0x3]
    %v410 = vlaneseq
    %v411 = vshrl.u32 %v410, 7
    %v412 = vsub.s32 0, %v411
    %v413 = vrot.slane %v408, %v412
    %v414 = vlaneseq
    %v415 = vshrl.u32 %v414, 7
    %v416 = vsub.s32 1, %v415
    %v417 = vrot.slane %v408, %v416
    %420 = vmatprep.subr.mxu0 %v377
    %421 = vmatpush1.msra.mxu0 %v376
    %422 = vmatprep.subr.mxu0 %v379
    %423 = vmatpush1.msra.mxu0 %v378
    %424 = vmatprep.subr.mxu0 %v381
    %425 = vmatpush1.msra.mxu0 %v380
    %426 = vmatprep.subr.mxu0 %v383
    %427 = vmatpush1.msra.mxu0 %v382
    %428 = vmatprep.subr.mxu0 %v385
    %429 = vmatpush1.msra.mxu0 %v384
    %430 = vmatprep.subr.mxu0 %v387
    %431 = vmatpush1.msra.mxu0 %v386
    %432 = vmatprep.subr.mxu0 %v389
    %433 = vmatpush1.msra.mxu0 %v388
    %434 = vmatprep.subr.mxu0 %v391
    %435 = vmatpush1.msra.mxu0 %v390
    %436 = vmatprep.subr.mxu0 %v393
    %437 = vmatpush1.msra.mxu0 %v392
    %438 = vmatprep.subr.mxu0 %v395
    %439 = vmatpush1.msra.mxu0 %v394
    %440 = vmatprep.subr.mxu0 %v397
    %441 = vmatpush1.msra.mxu0 %v396
    %442 = vmatprep.subr.mxu0 %v399
    %443 = vmatpush1.msra.mxu0 %v398
    %444 = vmatprep.subr.mxu0 %v401
    %445 = vmatpush1.msra.mxu0 %v400
    %446 = vmatprep.subr.mxu0 %v403
    %447 = vmatpush1.msra.mxu0 %v402
    %448 = vmatprep.subr.mxu0 %v405
    %449 = vmatpush1.msra.mxu0 %v404
    %450 = vmatprep.subr.mxu0 %v407
    %451 = vmatpush1.msra.mxu0 %v406
    %452 = vmatprep.subr.mxu0 0.0
    %453 = vmatpush1.msra.mxu0 0.0
    %454 = vmatprep.subr.mxu0 0.0
    %455 = vmatpush1.msra.mxu0 0.0
    %456 = vmatprep.subr.mxu0 0.0
    %457 = vmatpush1.msra.mxu0 0.0
    %458 = vmatprep.subr.mxu0 0.0
    %459 = vmatpush1.msra.mxu0 0.0
    %460 = vmatprep.subr.mxu0 0.0
    %461 = vmatpush1.msra.mxu0 0.0
    %462 = vmatprep.subr.mxu0 0.0
    %463 = vmatpush1.msra.mxu0 0.0
    %464 = vmatprep.subr.mxu0 0.0
    %465 = vmatpush1.msra.mxu0 0.0
    %466 = vmatprep.subr.mxu0 0.0
    %467 = vmatpush1.msra.mxu0 0.0
    %468 = vmatprep.subr.mxu0 0.0
    %469 = vmatpush1.msra.mxu0 0.0
    %470 = vmatprep.subr.mxu0 0.0
    %471 = vmatpush1.msra.mxu0 0.0
    %472 = vmatprep.subr.mxu0 0.0
    %473 = vmatpush1.msra.mxu0 0.0
    %474 = vmatprep.subr.mxu0 0.0
    %475 = vmatpush1.msra.mxu0 0.0
    %476 = vmatprep.subr.mxu0 0.0
    %477 = vmatpush1.msra.mxu0 0.0
    %478 = vmatprep.subr.mxu0 0.0
    %479 = vmatpush1.msra.mxu0 0.0
    %480 = vmatprep.subr.mxu0 0.0
    %481 = vmatpush1.msra.mxu0 0.0
    %482 = vmatprep.subr.mxu0 0.0
    %483 = vmatpush1.msra.mxu0 0.0
    %484 = vmatprep.mubr.f32.mxu0 0.0
    %485 = vmatmul.mubr.f32.gmra.mrb[0].mxu0 %v373
    %v486 = vpop.f32.mrb[0].mxu0
    %v487 = vadd.f32 %v413, %v486
    %v488 = vpop.f32.mrb[0].mxu0
    %v489 = vadd.f32 %v417, %v488
    %490 = vdwg.mxu0
    %v491 = vmax.f32 %v489, -20.0
    %v492 = vmin.f32 %v491, 2.0
    %493 = vst [vmem:[#allocation11] sm:$0xff] %v487
    %v494 = vmul.f32 %v492, 1.442695
    %v495 = vpow.pop %v494
    %496 = vst [vmem:[#allocation12] sm:$0xff] %v495
    // Predicated region
    $region58: #{policy_forward.1} parent=1 // pred_check
      _
    $region59: #{policy_forward.1} parent=1 // pred_check_branch
      %498 = sbr.rel (0) target = $region61
    $region60: #{policy_forward.1} parent=1 // pred_region
      %s500 = ssub.s32 128, 128
      %501 = vsyncadd [#allocation4], %s500
      %s503 = sshll.u32 [#allocation11], 4
      %s504 = int_to_ptr.vmem [resolvable:$true] %s503
      %506 = dma.vmem_to_hbm [thread:$0]  %s504, 128, %s9, [#allocation4]
    $region61: #{policy_forward.1} parent=1 // pred_fallthru
      _
    // Predicated region
    $region62: #{policy_forward.1} parent=1 // pred_check
      _
    $region63: #{policy_forward.1} parent=1 // pred_check_branch
      %508 = sbr.rel (0) target = $region65
    $region64: #{policy_forward.1} parent=1 // pred_region
      %s510 = ssub.s32 128, 128
      %511 = vsyncadd [#allocation13], %s510
      %s513 = sshll.u32 [#allocation12], 4
      %s514 = int_to_ptr.vmem [resolvable:$true] %s513
      %516 = dma.vmem_to_hbm [thread:$0]  %s514, 128, %s10, [#allocation13]
    $region65: #{policy_forward.1} parent=1 // pred_fallthru
      _
    // Predicated region
    $region66: #{policy_forward.1} parent=1 // pred_check
      _
    $region67: #{policy_forward.1} parent=1 // pred_check_branch
      %518 = sbr.rel (0) target = $region69
    $region68: #{policy_forward.1} parent=1 // pred_region
      %519 = dma.done [#allocation4], 128
    $region69: #{policy_forward.1} parent=1 // pred_fallthru
      _
    // Predicated region
    $region70: #{policy_forward.1} parent=1 // pred_check
      _
    $region71: #{policy_forward.1} parent=1 // pred_check_branch
      %521 = sbr.rel (0) target = $region73
    $region72: #{policy_forward.1} parent=1 // pred_region
      %522 = dma.done [#allocation13], 128
    $region73: #{policy_forward.1} parent=1 // pred_fallthru
      _
    %523 = vsyncpa [#allocation3], 1
    %524 = vsyncpa [#allocation6], 1
    %525 = vsyncpa [#allocation9], 1
    %526 = vsyncpa [#allocation4], 1
    %527 = vsyncpa [#allocation13], 1

</llo_original>
